<compile_context>
chip_gen: v7x
topology: tpu7x:2x2x1
jax: 0.10.0
libtpu: 0.0.40
codegen_flags: <defaults>
</compile_context>

<pallas_src>
import functools

import jax
import jax.numpy as jnp
from jax import lax
from jax.experimental import pallas as pl
from jax.experimental.pallas import tpu as pltpu


def _round_up(x, m):
    return (x + m - 1) // m * m


def _device_defaults():
    """(elementwise dtype, default batch tile) gated by TPU generation."""
    kind = jax.devices()[0].device_kind.lower()
    old_gen = any(v in kind for v in ("v2", "v3", "v4", "v5"))  # no bf16 VPU/EUP
    elem_dtype = jnp.float32 if old_gen else jnp.bfloat16
    tile_b = 2048 if old_gen else 4096
    return elem_dtype, tile_b


def actor_critic_kernel(obs_ref, w1_ref, b1_ref, w2_ref, b2_ref,
                        wh_ref, bh_ref, out_ref, *, action_size, elem_dtype):
    # Shared MLP: Linear -> Tanh -> Linear -> Tanh.
    # MXU operands bf16, f32 accumulation; tanh in elem_dtype (bf16 on v6e/v7x,
    # f32 on v5e-), log-softmax always f32.
    obs = obs_ref[...].astype(jnp.bfloat16)                       # [TB, obs]
    h1 = jnp.tanh(
        (jnp.dot(obs, w1_ref[...], preferred_element_type=jnp.float32)
         + b1_ref[...]).astype(elem_dtype)).astype(jnp.bfloat16)  # [TB, 256]
    h2 = jnp.tanh(
        (jnp.dot(h1, w2_ref[...], preferred_element_type=jnp.float32)
         + b2_ref[...]).astype(elem_dtype)).astype(jnp.bfloat16)  # [TB, 128]

    # Fused actor+critic head (narrow, round_up(A+1, 8) lanes):
    #   cols [0, A) -> actor logits, col A -> critic value, rest -> padding.
    head = (jnp.dot(h2, wh_ref[...], preferred_element_type=jnp.float32)
            + bh_ref[...])                                        # [TB, head_w] f32

    head_w = head.shape[-1]
    col = lax.broadcasted_iota(jnp.int32, (1, head_w), 1)         # batch-invariant
    is_logit = col < action_size

    # Masked log-softmax over the first `action_size` lanes only (f32).
    masked = jnp.where(is_logit, head, -jnp.inf)
    m = jnp.max(masked, axis=-1, keepdims=True)
    lse = m + jnp.log(jnp.sum(jnp.exp(masked - m), axis=-1, keepdims=True))

    # Pack log-probs (== Categorical.logits) and value into one narrow tile.
    out_ref[...] = jnp.where(is_logit, head - lse,
                             jnp.where(col == action_size, head, 0.0))


def prepare_params(params):
    """One-time per-parameter-set prep: fuse actor+critic head, cast weights bf16.

    Hoisted out of the per-step forward so the small fusion/cast XLA ops do not
    run on every call.
    """
    A = params["wa"].shape[1]
    head_w = _round_up(A + 1, 8)            # narrow fused-head width (logits + value)
    wh = jnp.zeros((128, head_w), jnp.float32)
    wh = wh.at[:, :A].set(params["wa"]).at[:, A].set(params["wc"][:, 0])
    bh = jnp.zeros((1, head_w), jnp.float32)
    bh = bh.at[:, :A].set(params["ba"]).at[:, A].set(params["bc"][:, 0])
    return dict(
        w1=params["w1"].astype(jnp.bfloat16), b1=params["b1"],
        w2=params["w2"].astype(jnp.bfloat16), b2=params["b2"],
        wh=wh.astype(jnp.bfloat16), bh=bh,
        action_size=A, head_w=head_w)


def actor_critic_forward(obs, prep, *, tile_b=None):
    """obs: [B, obs_size] float32. prep: prepare_params(...) output.

    Returns (logprobs [B, A], value [B, 1]).
    """
    B, obs_size = obs.shape
    A = int(prep["action_size"])
    head_w = int(prep["head_w"])

    elem_dtype, default_tile = _device_defaults()
    if tile_b is None:
        tile_b = default_tile
    tile_b = _round_up(max(tile_b, 8), 8)

    # Batch tiling: large tiles to amortize per-step overhead, but always >= 2
    # grid steps so v7x can shard the batch across both TensorCores.
    n_tiles = max(2, pl.cdiv(_round_up(B, 8), tile_b))
    TB = _round_up(pl.cdiv(B, n_tiles), 8)
    B_pad = TB * n_tiles
    if B_pad != B:
        obs = jnp.pad(obs, ((0, B_pad - B), (0, 0)))
    grid = (B_pad // TB,)

    def resident(a):  # whole array in VMEM, same block every grid step
        return pl.BlockSpec(a.shape, lambda i: (0,) * a.ndim)

    flops = 2 * B_pad * (obs_size * 256 + 256 * 128 + 128 * head_w)
    transcendentals = B_pad * (256 + 128 + A + 1)
    bytes_accessed = (obs.size * 4 + B_pad * head_w * 4
                      + prep["w1"].size * 2 + prep["w2"].size * 2
                      + prep["wh"].size * 2
                      + prep["b1"].size * 4 + prep["b2"].size * 4
                      + prep["bh"].size * 4)

    out = pl.pallas_call(
        functools.partial(actor_critic_kernel,
                          action_size=A, elem_dtype=elem_dtype),
        out_shape=jax.ShapeDtypeStruct((B_pad, head_w), jnp.float32),
        grid=grid,
        in_specs=[
            pl.BlockSpec((TB, obs_size), lambda i: (i, 0)),   # obs tile, pipelined
            resident(prep["w1"]), resident(prep["b1"]),
            resident(prep["w2"]), resident(prep["b2"]),
            resident(prep["wh"]), resident(prep["bh"]),
        ],
        out_specs=pl.BlockSpec((TB, head_w), lambda i: (i, 0)),
        compiler_params=pltpu.CompilerParams(
            dimension_semantics=("parallel",)),
        cost_estimate=pl.CostEstimate(
            flops=flops, transcendentals=transcendentals,
            bytes_accessed=bytes_accessed),
    )(obs, prep["w1"], prep["b1"], prep["w2"], prep["b2"],
      prep["wh"], prep["bh"])

    logprobs = out[:B, :A]          # Categorical(logits=...).logits (normalized)
    value = out[:B, A:A + 1]        # critic value [B, 1]
    return logprobs, value


def init_params(key, obs_size, action_size):
    """PyTorch-style uniform(-1/sqrt(fan_in)) init, stored as [in, out]."""
    def linear(k, fan_in, fan_out):
        kw, kb = jax.random.split(k)
        bound = 1.0 / jnp.sqrt(fan_in)
        w = jax.random.uniform(kw, (fan_in, fan_out), jnp.float32, -bound, bound)
        b = jax.random.uniform(kb, (1, fan_out), jnp.float32, -bound, bound)
        return w, b

    k1, k2, k3, k4 = jax.random.split(key, 4)
    w1, b1 = linear(k1, obs_size, 256)
    w2, b2 = linear(k2, 256, 128)
    wa, ba = linear(k3, 128, action_size)
    wc, bc = linear(k4, 128, 1)
    return dict(w1=w1, b1=b1, w2=w2, b2=b2, wa=wa, ba=ba, wc=wc, bc=bc)


def reference_forward(obs, params, elem_dtype=jnp.float32):
    """Pure-JAX reference mirroring the kernel's bf16-MXU / elem_dtype-tanh split."""
    w1 = params["w1"].astype(jnp.bfloat16)
    w2 = params["w2"].astype(jnp.bfloat16)
    wa = params["wa"].astype(jnp.bfloat16)
    wc = params["wc"].astype(jnp.bfloat16)
    h1 = jnp.tanh(
        (jnp.dot(obs.astype(jnp.bfloat16), w1, preferred_element_type=jnp.float32)
         + params["b1"]).astype(elem_dtype)).astype(jnp.bfloat16)
    h2 = jnp.tanh(
        (jnp.dot(h1, w2, preferred_element_type=jnp.float32)
         + params["b2"]).astype(elem_dtype)).astype(jnp.bfloat16)
    logits = jnp.dot(h2, wa, preferred_element_type=jnp.float32) + params["ba"]
    value = jnp.dot(h2, wc, preferred_element_type=jnp.float32) + params["bc"]
    logprobs = logits - jax.scipy.special.logsumexp(logits, axis=-1,
                                                    keepdims=True)
    return logprobs, value


if __name__ == "__main__":
    B, OBS_SIZE, ACTION_SIZE = 8, 32, 4

    key = jax.random.PRNGKey(0)
    k_obs, k_params = jax.random.split(key)
    obs = jax.random.normal(k_obs, (B, OBS_SIZE), jnp.float32)
    params = init_params(k_params, OBS_SIZE, ACTION_SIZE)

    prep = prepare_params(params)   # one-time weight fusion / bf16 cast (hoisted)

    logprobs, value = actor_critic_forward(obs, prep)
    jax.block_until_ready((logprobs, value))

    elem_dtype, _ = _device_defaults()
    ref_logprobs, ref_value = reference_forward(obs, params, elem_dtype)
    tol = 2e-3 if elem_dtype == jnp.float32 else 1e-2

    assert logprobs.shape == (B, ACTION_SIZE)
    assert value.shape == (B, 1)
    assert jnp.allclose(logprobs, ref_logprobs, atol=tol, rtol=tol)
    assert jnp.allclose(value, ref_value, atol=tol, rtol=tol)
    # log-probs must normalize (Categorical semantics); log-softmax is f32.
    assert jnp.allclose(jnp.sum(jnp.exp(logprobs), axis=-1), 1.0, atol=1e-4)

    print("KERNEL_OK")
</pallas_src>

<mosaic_0001>
module attributes {stable_mosaic.version = 11 : i64} {
  func.func @actor_critic_kernel(%arg0: i32, %arg1: memref<8x32xf32, #tpu.memory_space<vmem>>, %arg2: memref<32x256xbf16, #tpu.memory_space<vmem>>, %arg3: memref<1x256xf32, #tpu.memory_space<vmem>>, %arg4: memref<256x128xbf16, #tpu.memory_space<vmem>>, %arg5: memref<1x128xf32, #tpu.memory_space<vmem>>, %arg6: memref<128x8xbf16, #tpu.memory_space<vmem>>, %arg7: memref<1x8xf32, #tpu.memory_space<vmem>>, %arg8: memref<8x8xf32, #tpu.memory_space<vmem>>) attributes {dimension_semantics = [#tpu.dimension_semantics<parallel>], iteration_bounds = array<i64: 2>, scalar_prefetch = 0 : i64, scratch_operands = 0 : i64, tpu.core_type = #tpu.core_type<tc>, window_params = [{transform_indices = @transform_0, window_bounds = array<i64: 8, 32>}, {pipeline_mode = #tpu.pipeline_mode<synchronous>, transform_indices = @transform_1, window_bounds = array<i64: 32, 256>}, {pipeline_mode = #tpu.pipeline_mode<synchronous>, transform_indices = @transform_2, window_bounds = array<i64: 1, 256>}, {pipeline_mode = #tpu.pipeline_mode<synchronous>, transform_indices = @transform_3, window_bounds = array<i64: 256, 128>}, {pipeline_mode = #tpu.pipeline_mode<synchronous>, transform_indices = @transform_4, window_bounds = array<i64: 1, 128>}, {pipeline_mode = #tpu.pipeline_mode<synchronous>, transform_indices = @transform_5, window_bounds = array<i64: 128, 8>}, {pipeline_mode = #tpu.pipeline_mode<synchronous>, transform_indices = @transform_6, window_bounds = array<i64: 1, 8>}, {transform_indices = @transform_7, window_bounds = array<i64: 8, 8>}]} {
    %c0 = arith.constant 0 : index
    %c0_0 = arith.constant 0 : index
    %0 = vector.load %arg1[%c0, %c0_0] : memref<8x32xf32, #tpu.memory_space<vmem>>, vector<8x32xf32>
    %1 = arith.truncf %0 : vector<8x32xf32> to vector<8x32xbf16>
    %c0_1 = arith.constant 0 : index
    %c0_2 = arith.constant 0 : index
    %2 = vector.load %arg2[%c0_1, %c0_2] : memref<32x256xbf16, #tpu.memory_space<vmem>>, vector<32x256xbf16>
    %cst = arith.constant dense<0.000000e+00> : vector<8x256xf32>
    %3 = tpu.matmul %1, %2, %cst {dimension_numbers = #tpu.dot_dimension_numbers<[1], [0], [0], [1], [0, 0, 1, 1], [], []>} : vector<8x32xbf16>, vector<32x256xbf16>, vector<8x256xf32> -> vector<8x256xf32>
    %c0_3 = arith.constant 0 : index
    %c0_4 = arith.constant 0 : index
    %4 = vector.load %arg3[%c0_3, %c0_4] : memref<1x256xf32, #tpu.memory_space<vmem>>, vector<1x256xf32>
    %5 = vector.broadcast %4 : vector<1x256xf32> to vector<8x256xf32>
    %6 = arith.addf %3, %5 : vector<8x256xf32>
    %7 = arith.truncf %6 : vector<8x256xf32> to vector<8x256xbf16>
    %8 = math.tanh %7 : vector<8x256xbf16>
    %c0_5 = arith.constant 0 : index
    %c0_6 = arith.constant 0 : index
    %9 = vector.load %arg4[%c0_5, %c0_6] : memref<256x128xbf16, #tpu.memory_space<vmem>>, vector<256x128xbf16>
    %cst_7 = arith.constant dense<0.000000e+00> : vector<8x128xf32>
    %10 = tpu.matmul %8, %9, %cst_7 {dimension_numbers = #tpu.dot_dimension_numbers<[1], [0], [0], [1], [0, 0, 1, 1], [], []>} : vector<8x256xbf16>, vector<256x128xbf16>, vector<8x128xf32> -> vector<8x128xf32>
    %c0_8 = arith.constant 0 : index
    %c0_9 = arith.constant 0 : index
    %11 = vector.load %arg5[%c0_8, %c0_9] : memref<1x128xf32, #tpu.memory_space<vmem>>, vector<1x128xf32>
    %12 = vector.broadcast %11 : vector<1x128xf32> to vector<8x128xf32>
    %13 = arith.addf %10, %12 : vector<8x128xf32>
    %14 = arith.truncf %13 : vector<8x128xf32> to vector<8x128xbf16>
    %15 = math.tanh %14 : vector<8x128xbf16>
    %c0_10 = arith.constant 0 : index
    %c0_11 = arith.constant 0 : index
    %16 = vector.load %arg6[%c0_10, %c0_11] : memref<128x8xbf16, #tpu.memory_space<vmem>>, vector<128x8xbf16>
    %cst_12 = arith.constant dense<0.000000e+00> : vector<8x8xf32>
    %17 = tpu.matmul %15, %16, %cst_12 {dimension_numbers = #tpu.dot_dimension_numbers<[1], [0], [0], [1], [0, 0, 1, 1], [], []>} : vector<8x128xbf16>, vector<128x8xbf16>, vector<8x8xf32> -> vector<8x8xf32>
    %c0_13 = arith.constant 0 : index
    %c0_14 = arith.constant 0 : index
    %18 = vector.load %arg7[%c0_13, %c0_14] : memref<1x8xf32, #tpu.memory_space<vmem>>, vector<1x8xf32>
    %19 = vector.broadcast %18 : vector<1x8xf32> to vector<8x8xf32>
    %20 = arith.addf %17, %19 : vector<8x8xf32>
    %21 = tpu.iota {dimensions = array<i32: 1>} : vector<1x8xi32>
    %c4_i32 = arith.constant 4 : i32
    %22 = vector.broadcast %c4_i32 : i32 to vector<1x8xi32>
    %23 = arith.cmpi slt, %21, %22 : vector<1x8xi32>
    %cst_15 = arith.constant 0xFF800000 : f32
    %24 = vector.shape_cast %23 : vector<1x8xi1> to vector<1x8xi1>
    %25 = vector.broadcast %24 : vector<1x8xi1> to vector<8x8xi1>
    %26 = vector.broadcast %cst_15 : f32 to vector<8x8xf32>
    %27 = arith.select %25, %20, %26 : vector<8x8xi1>, vector<8x8xf32>
    %cst_16 = arith.constant dense<0xFF800000> : vector<8xf32>
    %28 = vector.multi_reduction <maximumf>, %27, %cst_16 [1] : vector<8x8xf32> to vector<8xf32>
    %29 = vector.shape_cast %28 : vector<8xf32> to vector<8x1xf32>
    %30 = vector.broadcast %29 : vector<8x1xf32> to vector<8x8xf32>
    %31 = arith.subf %27, %30 : vector<8x8xf32>
    %32 = math.exp %31 : vector<8x8xf32>
    %cst_17 = arith.constant dense<0.000000e+00> : vector<8xf32>
    %33 = vector.multi_reduction <add>, %32, %cst_17 [1] : vector<8x8xf32> to vector<8xf32>
    %34 = vector.shape_cast %33 : vector<8xf32> to vector<8x1xf32>
    %35 = math.log %34 : vector<8x1xf32>
    %36 = arith.addf %29, %35 : vector<8x1xf32>
    %37 = vector.broadcast %36 : vector<8x1xf32> to vector<8x8xf32>
    %38 = arith.subf %20, %37 : vector<8x8xf32>
    %c4_i32_18 = arith.constant 4 : i32
    %39 = vector.broadcast %c4_i32_18 : i32 to vector<1x8xi32>
    %40 = arith.cmpi eq, %21, %39 : vector<1x8xi32>
    %cst_19 = arith.constant 0.000000e+00 : f32
    %41 = vector.shape_cast %40 : vector<1x8xi1> to vector<1x8xi1>
    %42 = vector.broadcast %41 : vector<1x8xi1> to vector<8x8xi1>
    %43 = vector.broadcast %cst_19 : f32 to vector<8x8xf32>
    %44 = arith.select %42, %20, %43 : vector<8x8xi1>, vector<8x8xf32>
    %45 = vector.shape_cast %23 : vector<1x8xi1> to vector<1x8xi1>
    %46 = vector.broadcast %45 : vector<1x8xi1> to vector<8x8xi1>
    %47 = arith.select %46, %38, %44 : vector<8x8xi1>, vector<8x8xf32>
    %c0_20 = arith.constant 0 : index
    %c0_21 = arith.constant 0 : index
    %48 = vector.load %arg8[%c0_20, %c0_21] : memref<8x8xf32, #tpu.memory_space<vmem>>, vector<8x8xf32>
    tpu.vector_store %arg8[%c0_20, %c0_21], %47 {strides = array<i32>} : memref<8x8xf32, #tpu.memory_space<vmem>>, vector<8x8xf32>,
    return
  }
  func.func @transform_0(%arg0: i32) -> (i32, i32) {
    %c0_i32 = arith.constant 0 : i32
    %c0_i32_0 = arith.constant 0 : i32
    return %arg0, %c0_i32 : i32, i32
  }
  func.func @transform_1(%arg0: i32) -> (i32, i32) {
    %c0_i32 = arith.constant 0 : i32
    %c0_i32_0 = arith.constant 0 : i32
    %c0_i32_1 = arith.constant 0 : i32
    return %c0_i32, %c0_i32_0 : i32, i32
  }
  func.func @transform_2(%arg0: i32) -> (i32, i32) {
    %c0_i32 = arith.constant 0 : i32
    %c0_i32_0 = arith.constant 0 : i32
    %c0_i32_1 = arith.constant 0 : i32
    return %c0_i32, %c0_i32_0 : i32, i32
  }
  func.func @transform_3(%arg0: i32) -> (i32, i32) {
    %c0_i32 = arith.constant 0 : i32
    %c0_i32_0 = arith.constant 0 : i32
    %c0_i32_1 = arith.constant 0 : i32
    return %c0_i32, %c0_i32_0 : i32, i32
  }
  func.func @transform_4(%arg0: i32) -> (i32, i32) {
    %c0_i32 = arith.constant 0 : i32
    %c0_i32_0 = arith.constant 0 : i32
    %c0_i32_1 = arith.constant 0 : i32
    return %c0_i32, %c0_i32_0 : i32, i32
  }
  func.func @transform_5(%arg0: i32) -> (i32, i32) {
    %c0_i32 = arith.constant 0 : i32
    %c0_i32_0 = arith.constant 0 : i32
    %c0_i32_1 = arith.constant 0 : i32
    return %c0_i32, %c0_i32_0 : i32, i32
  }
  func.func @transform_6(%arg0: i32) -> (i32, i32) {
    %c0_i32 = arith.constant 0 : i32
    %c0_i32_0 = arith.constant 0 : i32
    %c0_i32_1 = arith.constant 0 : i32
    return %c0_i32, %c0_i32_0 : i32, i32
  }
  func.func @transform_7(%arg0: i32) -> (i32, i32) {
    %c0_i32 = arith.constant 0 : i32
    %c0_i32_0 = arith.constant 0 : i32
    return %arg0, %c0_i32 : i32, i32
  }
}

</mosaic_0001>

<llo_original>
// kernel: tpu_custom_call.1
$region0: #{tpu_custom_call.1}
  #allocation0 [shape = 'u32[]', space=smem, size = 0x4, offset = 0x4, fixed_abs, tag = 'smem constant byte address 0x4 - core index']
  #allocation1 [shape = 'u32[144,128]{1,0:T(1,128)}', space=vmem, size = 0x12000, scoped, tag = 'internal scratch']
  %s0 = inlined_call_operand.vmem [shape: f32[16,32], index: 0, kind: input, shape index: {}]
  %s1 = inlined_call_operand.vmem [shape: bf16[32,256], index: 1, kind: input, shape index: {}]
  %s2 = inlined_call_operand.vmem [shape: f32[1,256], index: 2, kind: input, shape index: {}]
  %s3 = inlined_call_operand.hbm [shape: bf16[256,128], index: 3, kind: input, shape index: {}]
  %s4 = inlined_call_operand.vmem [shape: f32[1,128], index: 4, kind: input, shape index: {}]
  %s5 = inlined_call_operand.vmem [shape: bf16[128,8], index: 5, kind: input, shape index: {}]
  %s6 = inlined_call_operand.vmem [shape: f32[1,8], index: 6, kind: input, shape index: {}]
  %s7 = inlined_call_operand.vmem [shape: f32[16,8], index: 7, kind: output, shape index: {}]
  %s8 = sld [smem:[#allocation0]]
  $region65: #{tpu_custom_call.1} parent=0
    _
  %s10 = ssub.s32 1, %s8
  %s11 = scalar_select 0, %s10, %s8
  $region1: #{tpu_custom_call.1} parent=0
    #allocation2 [shape = 'u8[65536]{0}', space=vmem, size = 0x10000, scoped, tag = 'input window, operand 3, single buffered']
    #allocation3 [shape = 's32[2]{0}', space=sflag, size = 0x8, scoped, tag = 'scoped memory for tpu_custom_call.1']
    %12 = vsyncpa [#allocation3], 0
    loop: start=0, step=1, limit=4
    $region2: #{tpu_custom_call.1} parent=1 // loop_pre_header
      _
    $region3: #{tpu_custom_call.1} parent=1 // loop_header
      %s14 = sphi 0, %s18
      %p15 = scmp.ge.s32.totalorder %s14, 4
      %s24 = sphi 0, %s26
      %s27 = sphi 0, %s24
      %s28 = sphi 0, %s27
      %s44 = sphi 0, %s28
      %s48 = sphi 0, %s48
      %s50 = sphi 0, %s48
      %s51 = sphi 0, %s50
      %s65 = sphi 0, %s51
      %s69 = sphi 0, %s69
      %s71 = sphi 0, %s69
      %s72 = sphi 0, %s71
      %s86 = sphi 0, %s72
      %s90 = sphi 0, %s90
      %s92 = sphi 0, %s90
      %s93 = sphi 0, %s92
      %s107 = sphi 0, %s93
      %s111 = sphi 0, %s111
      %s113 = sphi 0, %s111
      %s114 = sphi 0, %s113
      %s128 = sphi 0, %s114
      %s132 = sphi 0, %s132
      %s134 = sphi 0, %s132
      %s135 = sphi 0, %s134
      %s149 = sphi 0, %s135
      %s153 = sphi 0, %s153
      %s155 = sphi 0, %s153
      %s156 = sphi 0, %s155
      %s170 = sphi 0, %s156
      %s176 = sphi 0, %s178
      %s179 = sphi 0, %s176
      %s180 = sphi 0, %s179
      %s196 = sphi 0, %s180
    $region4: #{tpu_custom_call.1} parent=1 // loop_header_branch
      %17 = sbr.rel (%p15) target = $region8
    $region5: #{tpu_custom_call.1} parent=1 // loop_body
      %s19 = ssub.s32 %s14, 1
      %s20 = ssub.s32 %s14, 2
      %s21 = sadd.s32 %s14, 1
      %s22 = ssub.s32 %s14, %s21
      %p23 = scmp.eq.s32.totalorder %s22, 0
      %s25 = sadd.s32 %s24, 1
      %s26 = scalar_select %p23, %s24, %s25
      %p29 = pneg %p23
      %p30 = scmp.eq.s32.totalorder %s14, 1
      %p31 = por %p29, %p30
      %p32 = scmp.ne.s32.totalorder %s24, %s27
      %p33 = scmp.eq.s32.totalorder %s14, 0
      %p34 = por %p32, %p33
      %p35 = scmp.ne.s32.totalorder %s24, %s27
      %p36 = scmp.eq.s32.totalorder %s19, 1
      %p37 = por %p35, %p36
      %p38 = scmp.ne.s32.totalorder %s27, %s28
      %p39 = scmp.eq.s32.totalorder %s19, 0
      %p40 = por %p38, %p39
      %p41 = scmp.ne.s32.totalorder %s27, %s28
      %p42 = scmp.eq.s32.totalorder %s20, 1
      %p43 = por %p41, %p42
      %p45 = scmp.ne.s32.totalorder %s28, %s44
      %p46 = scmp.eq.s32.totalorder %s20, 0
      %p47 = por %p45, %p46
      %s49 = sadd.s32 %s48, 1
      %p52 = scmp.eq.s32.totalorder %s14, 1
      %p53 = scmp.ne.s32.totalorder %s48, %s50
      %p54 = scmp.eq.s32.totalorder %s14, 0
      %p55 = por %p53, %p54
      %p56 = scmp.ne.s32.totalorder %s48, %s50
      %p57 = scmp.eq.s32.totalorder %s19, 1
      %p58 = por %p56, %p57
      %p59 = scmp.ne.s32.totalorder %s50, %s51
      %p60 = scmp.eq.s32.totalorder %s19, 0
      %p61 = por %p59, %p60
      %p62 = scmp.ne.s32.totalorder %s50, %s51
      %p63 = scmp.eq.s32.totalorder %s20, 1
      %p64 = por %p62, %p63
      %p66 = scmp.ne.s32.totalorder %s51, %s65
      %p67 = scmp.eq.s32.totalorder %s20, 0
      %p68 = por %p66, %p67
      %s70 = sadd.s32 %s69, 1
      %p73 = scmp.eq.s32.totalorder %s14, 1
      %p74 = scmp.ne.s32.totalorder %s69, %s71
      %p75 = scmp.eq.s32.totalorder %s14, 0
      %p76 = por %p74, %p75
      %p77 = scmp.ne.s32.totalorder %s69, %s71
      %p78 = scmp.eq.s32.totalorder %s19, 1
      %p79 = por %p77, %p78
      %p80 = scmp.ne.s32.totalorder %s71, %s72
      %p81 = scmp.eq.s32.totalorder %s19, 0
      %p82 = por %p80, %p81
      %p83 = scmp.ne.s32.totalorder %s71, %s72
      %p84 = scmp.eq.s32.totalorder %s20, 1
      %p85 = por %p83, %p84
      %p87 = scmp.ne.s32.totalorder %s72, %s86
      %p88 = scmp.eq.s32.totalorder %s20, 0
      %p89 = por %p87, %p88
      %s91 = sadd.s32 %s90, 1
      %p94 = scmp.eq.s32.totalorder %s14, 1
      %p95 = scmp.ne.s32.totalorder %s90, %s92
      %p96 = scmp.eq.s32.totalorder %s14, 0
      %p97 = por %p95, %p96
      %p98 = scmp.ne.s32.totalorder %s90, %s92
      %p99 = scmp.eq.s32.totalorder %s19, 1
      %p100 = por %p98, %p99
      %p101 = scmp.ne.s32.totalorder %s92, %s93
      %p102 = scmp.eq.s32.totalorder %s19, 0
      %p103 = por %p101, %p102
      %p104 = scmp.ne.s32.totalorder %s92, %s93
      %p105 = scmp.eq.s32.totalorder %s20, 1
      %p106 = por %p104, %p105
      %p108 = scmp.ne.s32.totalorder %s93, %s107
      %p109 = scmp.eq.s32.totalorder %s20, 0
      %p110 = por %p108, %p109
      %s112 = sadd.s32 %s111, 1
      %p115 = scmp.eq.s32.totalorder %s14, 1
      %p116 = scmp.ne.s32.totalorder %s111, %s113
      %p117 = scmp.eq.s32.totalorder %s14, 0
      %p118 = por %p116, %p117
      %p119 = scmp.ne.s32.totalorder %s111, %s113
      %p120 = scmp.eq.s32.totalorder %s19, 1
      %p121 = por %p119, %p120
      %p122 = scmp.ne.s32.totalorder %s113, %s114
      %p123 = scmp.eq.s32.totalorder %s19, 0
      %p124 = por %p122, %p123
      %p125 = scmp.ne.s32.totalorder %s113, %s114
      %p126 = scmp.eq.s32.totalorder %s20, 1
      %p127 = por %p125, %p126
      %p129 = scmp.ne.s32.totalorder %s114, %s128
      %p130 = scmp.eq.s32.totalorder %s20, 0
      %p131 = por %p129, %p130
      %s133 = sadd.s32 %s132, 1
      %p136 = scmp.eq.s32.totalorder %s14, 1
      %p137 = scmp.ne.s32.totalorder %s132, %s134
      %p138 = scmp.eq.s32.totalorder %s14, 0
      %p139 = por %p137, %p138
      %p140 = scmp.ne.s32.totalorder %s132, %s134
      %p141 = scmp.eq.s32.totalorder %s19, 1
      %p142 = por %p140, %p141
      %p143 = scmp.ne.s32.totalorder %s134, %s135
      %p144 = scmp.eq.s32.totalorder %s19, 0
      %p145 = por %p143, %p144
      %p146 = scmp.ne.s32.totalorder %s134, %s135
      %p147 = scmp.eq.s32.totalorder %s20, 1
      %p148 = por %p146, %p147
      %p150 = scmp.ne.s32.totalorder %s135, %s149
      %p151 = scmp.eq.s32.totalorder %s20, 0
      %p152 = por %p150, %p151
      %s154 = sadd.s32 %s153, 1
      %p157 = scmp.eq.s32.totalorder %s14, 1
      %p158 = scmp.ne.s32.totalorder %s153, %s155
      %p159 = scmp.eq.s32.totalorder %s14, 0
      %p160 = por %p158, %p159
      %p161 = scmp.ne.s32.totalorder %s153, %s155
      %p162 = scmp.eq.s32.totalorder %s19, 1
      %p163 = por %p161, %p162
      %p164 = scmp.ne.s32.totalorder %s155, %s156
      %p165 = scmp.eq.s32.totalorder %s19, 0
      %p166 = por %p164, %p165
      %p167 = scmp.ne.s32.totalorder %s155, %s156
      %p168 = scmp.eq.s32.totalorder %s20, 1
      %p169 = por %p167, %p168
      %p171 = scmp.ne.s32.totalorder %s156, %s170
      %p172 = scmp.eq.s32.totalorder %s20, 0
      %p173 = por %p171, %p172
      %s174 = ssub.s32 %s14, %s21
      %p175 = scmp.eq.s32.totalorder %s174, 0
      %s177 = sadd.s32 %s176, 1
      %s178 = scalar_select %p175, %s176, %s177
      %p181 = pneg %p175
      %p182 = scmp.eq.s32.totalorder %s14, 1
      %p183 = por %p181, %p182
      %p184 = scmp.ne.s32.totalorder %s176, %s179
      %p185 = scmp.eq.s32.totalorder %s14, 0
      %p186 = por %p184, %p185
      %p187 = scmp.ne.s32.totalorder %s176, %s179
      %p188 = scmp.eq.s32.totalorder %s19, 1
      %p189 = por %p187, %p188
      %p190 = scmp.ne.s32.totalorder %s179, %s180
      %p191 = scmp.eq.s32.totalorder %s19, 0
      %p192 = por %p190, %p191
      %p193 = scmp.ne.s32.totalorder %s179, %s180
      %p194 = scmp.eq.s32.totalorder %s20, 1
      %p195 = por %p193, %p194
      %p197 = scmp.ne.s32.totalorder %s180, %s196
      %p198 = scmp.eq.s32.totalorder %s20, 0
      %p199 = por %p197, %p198
      %p200 = scmp.le.s32.totalorder 1, %s14
      %p201 = scmp.lt.s32.totalorder %s14, 3
      %p202 = pnand %p200, %p201
      %p203 = pneg %p202
      // Predicated region
      $region9: #{tpu_custom_call.1} parent=5 // pred_check
        _
      $region10: #{tpu_custom_call.1} parent=5 // pred_check_branch
        %205 = sbr.rel (%p202) target = $region12
      $region11: #{tpu_custom_call.1} parent=5 // pred_region
        %s206 = ssub.s32 %s14, 1
        // Predicated region
        $region13: #{tpu_custom_call.1} parent=11 // pred_check
          %p207 = pneg %p61
        $region14: #{tpu_custom_call.1} parent=11 // pred_check_branch
          %209 = sbr.rel (%p207) target = $region16
        $region15: #{tpu_custom_call.1} parent=11 // pred_region
          _
        $region16: #{tpu_custom_call.1} parent=11 // pred_fallthru
          _
        // Predicated region
        $region17: #{tpu_custom_call.1} parent=11 // pred_check
          %p210 = pneg %p82
        $region18: #{tpu_custom_call.1} parent=11 // pred_check_branch
          %212 = sbr.rel (%p210) target = $region20
        $region19: #{tpu_custom_call.1} parent=11 // pred_region
          _
        $region20: #{tpu_custom_call.1} parent=11 // pred_fallthru
          _
        // Predicated region
        $region21: #{tpu_custom_call.1} parent=11 // pred_check
          %p213 = pneg %p103
        $region22: #{tpu_custom_call.1} parent=11 // pred_check_branch
          %215 = sbr.rel (%p213) target = $region24
        $region23: #{tpu_custom_call.1} parent=11 // pred_region
          %s217 = ssub.s32 2048, 2048
          %218 = vsyncadd [#allocation3], %s217
          %s219 = sshll.u32 [#allocation2], 4
          %s220 = int_to_ptr.vmem [resolvable:$true] %s219
          %225 = dma.hbm_to_vmem [thread:$0]  %s3, 2048, %s220, [#allocation3], 64, 64, 4
        $region24: #{tpu_custom_call.1} parent=11 // pred_fallthru
          _
        // Predicated region
        $region25: #{tpu_custom_call.1} parent=11 // pred_check
          %p226 = pneg %p124
        $region26: #{tpu_custom_call.1} parent=11 // pred_check_branch
          %228 = sbr.rel (%p226) target = $region28
        $region27: #{tpu_custom_call.1} parent=11 // pred_region
          _
        $region28: #{tpu_custom_call.1} parent=11 // pred_fallthru
          _
        // Predicated region
        $region29: #{tpu_custom_call.1} parent=11 // pred_check
          %p229 = pneg %p145
        $region30: #{tpu_custom_call.1} parent=11 // pred_check_branch
          %231 = sbr.rel (%p229) target = $region32
        $region31: #{tpu_custom_call.1} parent=11 // pred_region
          _
        $region32: #{tpu_custom_call.1} parent=11 // pred_fallthru
          _
        // Predicated region
        $region33: #{tpu_custom_call.1} parent=11 // pred_check
          %p232 = pneg %p166
        $region34: #{tpu_custom_call.1} parent=11 // pred_check_branch
          %234 = sbr.rel (%p232) target = $region36
        $region35: #{tpu_custom_call.1} parent=11 // pred_region
          _
        $region36: #{tpu_custom_call.1} parent=11 // pred_fallthru
          _
      $region12: #{tpu_custom_call.1} parent=5 // pred_fallthru
        _
      %p235 = scmp.lt.s32.totalorder %s14, 2
      // Predicated region
      $region37: #{tpu_custom_call.1} parent=5 // pred_check
        %p236 = pneg %p235
      $region38: #{tpu_custom_call.1} parent=5 // pred_check_branch
        %238 = sbr.rel (%p236) target = $region40
      $region39: #{tpu_custom_call.1} parent=5 // pred_region
        // Predicated region
        $region41: #{tpu_custom_call.1} parent=39 // pred_check
          %p239 = pneg %p34
        $region42: #{tpu_custom_call.1} parent=39 // pred_check_branch
          %241 = sbr.rel (%p239) target = $region44
        $region43: #{tpu_custom_call.1} parent=39 // pred_region
          %p242 = scmp.lt.s32.totalorder %s14, 1
          %s243 = scalar_select %p242, %s14, 1
          %s244 = smul.addr %s243, 8
          %s245 = scalar_lea.vmem %s0, %s244
        $region44: #{tpu_custom_call.1} parent=39 // pred_fallthru
          _
      $region40: #{tpu_custom_call.1} parent=5 // pred_fallthru
        _
      %p246 = scmp.le.s32.totalorder 1, %s14
      %p247 = scmp.lt.s32.totalorder %s14, 3
      %p248 = pnand %p246, %p247
      %p249 = pneg %p248
      // Predicated region
      $region45: #{tpu_custom_call.1} parent=5 // pred_check
        _
      $region46: #{tpu_custom_call.1} parent=5 // pred_check_branch
        %251 = sbr.rel (%p248) target = $region48
      $region47: #{tpu_custom_call.1} parent=5 // pred_region
        %s252 = ssub.s32 %s14, 1
        // Predicated region
        $region49: #{tpu_custom_call.1} parent=47 // pred_check
          %p253 = pneg %p103
        $region50: #{tpu_custom_call.1} parent=47 // pred_check_branch
          %255 = sbr.rel (%p253) target = $region52
        $region51: #{tpu_custom_call.1} parent=47 // pred_region
          %256 = dma.done [#allocation3], 2048
        $region52: #{tpu_custom_call.1} parent=47 // pred_fallthru
          _
        %p257 = scmp.lt.s32.totalorder %s19, 1
        %s258 = scalar_select %p257, %s19, 1
        %s259 = smul.addr %s258, 8
        %s260 = scalar_lea.vmem %s0, %s259
        %p261 = pneg %p40
        %p262 = pneg %p37
        %p263 = pneg %p61
        %p264 = pneg %p58
        %p265 = pneg %p82
        %p266 = pneg %p79
        %p267 = pneg %p103
        %p268 = pneg %p100
        %p269 = pneg %p124
        %p270 = pneg %p121
        %p271 = pneg %p145
        %p272 = pneg %p142
        %p273 = pneg %p166
        %p274 = pneg %p163
        %p275 = pneg %p192
        %p276 = pneg %p189
        %p277 = scmp.lt.s32.totalorder %s19, 1
        %s278 = scalar_select %p277, %s19, 1
        %s279 = smul.addr %s278, 8
        %s280 = scalar_lea.vmem %s7, %s279
        %p281 = scmp.lt.s32.totalorder %s19, 1
        %s282 = scalar_select %p281, %s19, 1
        %s283 = smul.addr %s282, 8
        %s284 = scalar_lea.vmem %s0, %s283
        %p285 = scmp.lt.s32.totalorder %s19, 1
        %s286 = scalar_select %p285, %s19, 1
        %s287 = smul.addr %s286, 8
        %s288 = scalar_lea.vmem %s7, %s287
        %v290 = vld [vmem:[%s284] sm:$0xff]
        %v291 = vpack.c.bf16 %v290, %v290
        %v292 = vld [vmem:[%s1] sm:$0xff]
        %v293 = vld [vmem:[%s1 + $0x8] sm:$0xff]
        %v294 = vld [vmem:[%s1 + $0x10] sm:$0xff]
        %v295 = vld [vmem:[%s1 + $0x18] sm:$0xff]
        %v296 = vld [vmem:[%s2] sm:$0x3]
        %v298 = vlaneseq
        %v299 = vshrl.u32 %v298, 7
        %v300 = vsub.s32 0, %v299
        %v301 = vrot.slane %v296, %v300
        %v302 = vlaneseq
        %v303 = vshrl.u32 %v302, 7
        %v304 = vsub.s32 1, %v303
        %v305 = vrot.slane %v296, %v304
        %v312 = vunpack.c.l.b16 %v292
        %v313 = vunpack.c.h.b16 %v292
        %v314 = vunpack.c.l.b16 %v293
        %v315 = vunpack.c.h.b16 %v293
        %v316 = vunpack.c.l.b16 %v294
        %v317 = vunpack.c.h.b16 %v294
        %v318 = vunpack.c.l.b16 %v295
        %v319 = vunpack.c.h.b16 %v295
        %v320 = vpack.c.b16 %v314, %v312
        %v321 = vpack.c.b16 %v315, %v313
        %v322 = vpack.c.b16 %v318, %v316
        %v323 = vpack.c.b16 %v319, %v317
        %vm328 = vcmask 261120
        %v330 = vsel %vm328, %v291, 0
        %332 = vmatprep.subr.bf16.mxu0 %v321
        %333 = vmatpush1.bf16.msra.mxu0 %v320
        %334 = vmatprep.subr.bf16.mxu0 %v323
        %335 = vmatpush1.bf16.msra.mxu0 %v322
        %336 = vmatprep.subr.bf16.mxu0 0
        %337 = vmatpush1.bf16.msra.mxu0 0
        %338 = vmatprep.subr.bf16.mxu0 0
        %339 = vmatpush1.bf16.msra.mxu0 0
        %340 = vmatprep.subr.bf16.mxu0 0
        %341 = vmatpush1.bf16.msra.mxu0 0
        %342 = vmatprep.subr.bf16.mxu0 0
        %343 = vmatpush1.bf16.msra.mxu0 0
        %344 = vmatprep.subr.bf16.mxu0 0
        %345 = vmatpush1.bf16.msra.mxu0 0
        %346 = vmatprep.subr.bf16.mxu0 0
        %347 = vmatpush1.bf16.msra.mxu0 0
        %348 = vmatprep.subr.bf16.mxu0 0
        %349 = vmatpush1.bf16.msra.mxu0 0
        %350 = vmatprep.subr.bf16.mxu0 0
        %351 = vmatpush1.bf16.msra.mxu0 0
        %352 = vmatprep.subr.bf16.mxu0 0
        %353 = vmatpush1.bf16.msra.mxu0 0
        %354 = vmatprep.subr.bf16.mxu0 0
        %355 = vmatpush1.bf16.msra.mxu0 0
        %356 = vmatprep.subr.bf16.mxu0 0
        %357 = vmatpush1.bf16.msra.mxu0 0
        %358 = vmatprep.subr.bf16.mxu0 0
        %359 = vmatpush1.bf16.msra.mxu0 0
        %360 = vmatprep.subr.bf16.mxu0 0
        %361 = vmatpush1.bf16.msra.mxu0 0
        %362 = vmatprep.subr.bf16.mxu0 0
        %363 = vmatpush1.bf16.msra.mxu0 0
        %364 = vmatprep.mubr.bf16.mxu0 0
        %365 = vmatmul.mubr.bf16.gmra.mrb[0].mxu0 %v330
        %v366 = vpop.f32.mrb[0].mxu0
        %v367 = vadd.f32 %v301, %v366
        %v368 = vpop.f32.mrb[0].mxu0
        %v369 = vadd.f32 %v305, %v368
        %v370 = vpop.f32.mrb[0].mxu0
        %v371 = vpop.f32.mrb[0].mxu0
        %372 = vdwg.mxu0
        %v373 = vpack.c.bf16 %v367, %v367
        %v374 = vpack.c.bf16 %v369, %v369
        %v375 = vtanh.bf16.pop %v373
        %v376 = vtanh.bf16.pop %v374
        %v377 = vld [vmem:[#allocation2] sm:$0xf]
        %v378 = vld [vmem:[#allocation2 + $0x4] sm:$0xf]
        %v379 = vld [vmem:[#allocation2 + $0x8] sm:$0xf]
        %v380 = vld [vmem:[#allocation2 + $0xc] sm:$0xf]
        %v381 = vld [vmem:[#allocation2 + $0x10] sm:$0xf]
        %v382 = vld [vmem:[#allocation2 + $0x14] sm:$0xf]
        %v383 = vld [vmem:[#allocation2 + $0x18] sm:$0xf]
        %v384 = vld [vmem:[#allocation2 + $0x1c] sm:$0xf]
        %v385 = vld [vmem:[#allocation2 + $0x20] sm:$0xf]
        %v386 = vld [vmem:[#allocation2 + $0x24] sm:$0xf]
        %v387 = vld [vmem:[#allocation2 + $0x28] sm:$0xf]
        %v388 = vld [vmem:[#allocation2 + $0x2c] sm:$0xf]
        %v389 = vld [vmem:[#allocation2 + $0x30] sm:$0xf]
        %v390 = vld [vmem:[#allocation2 + $0x34] sm:$0xf]
        %v391 = vld [vmem:[#allocation2 + $0x38] sm:$0xf]
        %v392 = vld [vmem:[#allocation2 + $0x3c] sm:$0xf]
        %v393 = vld [vmem:[#allocation2 + $0x40] sm:$0xf]
        %v394 = vld [vmem:[#allocation2 + $0x44] sm:$0xf]
        %v395 = vld [vmem:[#allocation2 + $0x48] sm:$0xf]
        %v396 = vld [vmem:[#allocation2 + $0x4c] sm:$0xf]
        %v397 = vld [vmem:[#allocation2 + $0x50] sm:$0xf]
        %v398 = vld [vmem:[#allocation2 + $0x54] sm:$0xf]
        %v399 = vld [vmem:[#allocation2 + $0x58] sm:$0xf]
        %v400 = vld [vmem:[#allocation2 + $0x5c] sm:$0xf]
        %v401 = vld [vmem:[#allocation2 + $0x60] sm:$0xf]
        %v402 = vld [vmem:[#allocation2 + $0x64] sm:$0xf]
        %v403 = vld [vmem:[#allocation2 + $0x68] sm:$0xf]
        %v404 = vld [vmem:[#allocation2 + $0x6c] sm:$0xf]
        %v405 = vld [vmem:[#allocation2 + $0x70] sm:$0xf]
        %v406 = vld [vmem:[#allocation2 + $0x74] sm:$0xf]
        %v407 = vld [vmem:[#allocation2 + $0x78] sm:$0xf]
        %v408 = vld [vmem:[#allocation2 + $0x7c] sm:$0xf]
        %v409 = vld [vmem:[%s4] sm:$0x1]
        %v411 = vlaneseq
        %v412 = vshrl.u32 %v411, 7
        %v413 = vsub.s32 0, %v412
        %v414 = vrot.slane %v409, %v413
        %v448 = vunpack.c.l.b16 %v377
        %v449 = vunpack.c.l.b16 %v378
        %v450 = vunpack.c.l.b16 %v379
        %v451 = vunpack.c.l.b16 %v380
        %v452 = vunpack.c.l.b16 %v381
        %v453 = vunpack.c.l.b16 %v382
        %v454 = vunpack.c.l.b16 %v383
        %v455 = vunpack.c.l.b16 %v384
        %v456 = vunpack.c.l.b16 %v385
        %v457 = vunpack.c.l.b16 %v386
        %v458 = vunpack.c.l.b16 %v387
        %v459 = vunpack.c.l.b16 %v388
        %v460 = vunpack.c.l.b16 %v389
        %v461 = vunpack.c.l.b16 %v390
        %v462 = vunpack.c.l.b16 %v391
        %v463 = vunpack.c.l.b16 %v392
        %v464 = vunpack.c.l.b16 %v393
        %v465 = vunpack.c.l.b16 %v394
        %v466 = vunpack.c.l.b16 %v395
        %v467 = vunpack.c.l.b16 %v396
        %v468 = vunpack.c.l.b16 %v397
        %v469 = vunpack.c.l.b16 %v398
        %v470 = vunpack.c.l.b16 %v399
        %v471 = vunpack.c.l.b16 %v400
        %v472 = vunpack.c.l.b16 %v401
        %v473 = vunpack.c.l.b16 %v402
        %v474 = vunpack.c.l.b16 %v403
        %v475 = vunpack.c.l.b16 %v404
        %v476 = vunpack.c.l.b16 %v405
        %v477 = vunpack.c.l.b16 %v406
        %v478 = vunpack.c.l.b16 %v407
        %v479 = vunpack.c.l.b16 %v408
        %v480 = vpack.c.b16 %v449, %v448
        %v481 = vpack.c.b16 %v451, %v450
        %v482 = vpack.c.b16 %v453, %v452
        %v483 = vpack.c.b16 %v455, %v454
        %v484 = vpack.c.b16 %v457, %v456
        %v485 = vpack.c.b16 %v459, %v458
        %v486 = vpack.c.b16 %v461, %v460
        %v487 = vpack.c.b16 %v463, %v462
        %v488 = vpack.c.b16 %v465, %v464
        %v489 = vpack.c.b16 %v467, %v466
        %v490 = vpack.c.b16 %v469, %v468
        %v491 = vpack.c.b16 %v471, %v470
        %v492 = vpack.c.b16 %v473, %v472
        %v493 = vpack.c.b16 %v475, %v474
        %v494 = vpack.c.b16 %v477, %v476
        %v495 = vpack.c.b16 %v479, %v478
        %512 = vmatprep.subr.bf16.mxu0 0
        %513 = vmatpush1.bf16.msra.mxu0 %v480
        %514 = vmatprep.subr.bf16.mxu0 0
        %515 = vmatpush1.bf16.msra.mxu0 %v481
        %516 = vmatprep.subr.bf16.mxu0 0
        %517 = vmatpush1.bf16.msra.mxu0 %v482
        %518 = vmatprep.subr.bf16.mxu0 0
        %519 = vmatpush1.bf16.msra.mxu0 %v483
        %520 = vmatprep.subr.bf16.mxu0 0
        %521 = vmatpush1.bf16.msra.mxu0 %v484
        %522 = vmatprep.subr.bf16.mxu0 0
        %523 = vmatpush1.bf16.msra.mxu0 %v485
        %524 = vmatprep.subr.bf16.mxu0 0
        %525 = vmatpush1.bf16.msra.mxu0 %v486
        %526 = vmatprep.subr.bf16.mxu0 0
        %527 = vmatpush1.bf16.msra.mxu0 %v487
        %528 = vmatprep.subr.bf16.mxu0 0
        %529 = vmatpush1.bf16.msra.mxu0 %v488
        %530 = vmatprep.subr.bf16.mxu0 0
        %531 = vmatpush1.bf16.msra.mxu0 %v489
        %532 = vmatprep.subr.bf16.mxu0 0
        %533 = vmatpush1.bf16.msra.mxu0 %v490
        %534 = vmatprep.subr.bf16.mxu0 0
        %535 = vmatpush1.bf16.msra.mxu0 %v491
        %536 = vmatprep.subr.bf16.mxu0 0
        %537 = vmatpush1.bf16.msra.mxu0 %v492
        %538 = vmatprep.subr.bf16.mxu0 0
        %539 = vmatpush1.bf16.msra.mxu0 %v493
        %540 = vmatprep.subr.bf16.mxu0 0
        %541 = vmatpush1.bf16.msra.mxu0 %v494
        %542 = vmatprep.subr.bf16.mxu0 0
        %543 = vmatpush1.bf16.msra.mxu0 %v495
        %544 = vmatprep.mubr.bf16.mxu0 %v376
        %545 = vmatmul.mubr.bf16.gmra.mrb[0].mxu0 %v375
        %v546 = vpop.f32.mrb[0].mxu0
        %v547 = vadd.f32 %v414, %v546
        %v548 = vpop.f32.mrb[0].mxu0
        %v549 = vpop.f32.mrb[0].mxu0
        %v550 = vpop.f32.mrb[0].mxu0
        %551 = vdwg.mxu0
        %v552 = vpack.c.bf16 %v547, %v547
        %v553 = vtanh.bf16.pop %v552
        %v554 = vld [vmem:[%s5] sm:$0xf]
        %v555 = vld [vmem:[%s5 + $0x4] sm:$0xf]
        %v556 = vld [vmem:[%s5 + $0x8] sm:$0xf]
        %v557 = vld [vmem:[%s5 + $0xc] sm:$0xf]
        %v558 = vld [vmem:[%s5 + $0x10] sm:$0xf]
        %v559 = vld [vmem:[%s5 + $0x14] sm:$0xf]
        %v560 = vld [vmem:[%s5 + $0x18] sm:$0xf]
        %v561 = vld [vmem:[%s5 + $0x1c] sm:$0xf]
        %v562 = vld [vmem:[%s5 + $0x20] sm:$0xf]
        %v563 = vld [vmem:[%s5 + $0x24] sm:$0xf]
        %v564 = vld [vmem:[%s5 + $0x28] sm:$0xf]
        %v565 = vld [vmem:[%s5 + $0x2c] sm:$0xf]
        %v566 = vld [vmem:[%s5 + $0x30] sm:$0xf]
        %v567 = vld [vmem:[%s5 + $0x34] sm:$0xf]
        %v568 = vld [vmem:[%s5 + $0x38] sm:$0xf]
        %v569 = vld [vmem:[%s5 + $0x3c] sm:$0xf]
        %v570 = vld [vmem:[%s6] sm:$0x1]
        %v572 = vlaneseq
        %v573 = vshrl.u32 %v572, 7
        %v574 = vsub.s32 0, %v573
        %v575 = vrot.slane %v570, %v574
        %v593 = vunpack.c.l.b16 %v554
        %v594 = vunpack.c.l.b16 %v555
        %v595 = vunpack.c.l.b16 %v556
        %v596 = vunpack.c.l.b16 %v557
        %v597 = vunpack.c.l.b16 %v558
        %v598 = vunpack.c.l.b16 %v559
        %v599 = vunpack.c.l.b16 %v560
        %v600 = vunpack.c.l.b16 %v561
        %v601 = vunpack.c.l.b16 %v562
        %v602 = vunpack.c.l.b16 %v563
        %v603 = vunpack.c.l.b16 %v564
        %v604 = vunpack.c.l.b16 %v565
        %v605 = vunpack.c.l.b16 %v566
        %v606 = vunpack.c.l.b16 %v567
        %v607 = vunpack.c.l.b16 %v568
        %v608 = vunpack.c.l.b16 %v569
        %v609 = vpack.c.b16 %v594, %v593
        %v610 = vpack.c.b16 %v596, %v595
        %v611 = vpack.c.b16 %v598, %v597
        %v612 = vpack.c.b16 %v600, %v599
        %v613 = vpack.c.b16 %v602, %v601
        %v614 = vpack.c.b16 %v604, %v603
        %v615 = vpack.c.b16 %v606, %v605
        %v616 = vpack.c.b16 %v608, %v607
        %625 = vmatprep.subr.bf16.mxu0 0
        %626 = vmatpush1.bf16.msra.mxu0 %v609
        %627 = vmatprep.subr.bf16.mxu0 0
        %628 = vmatpush1.bf16.msra.mxu0 %v610
        %629 = vmatprep.subr.bf16.mxu0 0
        %630 = vmatpush1.bf16.msra.mxu0 %v611
        %631 = vmatprep.subr.bf16.mxu0 0
        %632 = vmatpush1.bf16.msra.mxu0 %v612
        %633 = vmatprep.subr.bf16.mxu0 0
        %634 = vmatpush1.bf16.msra.mxu0 %v613
        %635 = vmatprep.subr.bf16.mxu0 0
        %636 = vmatpush1.bf16.msra.mxu0 %v614
        %637 = vmatprep.subr.bf16.mxu0 0
        %638 = vmatpush1.bf16.msra.mxu0 %v615
        %639 = vmatprep.subr.bf16.mxu0 0
        %640 = vmatpush1.bf16.msra.mxu0 %v616
        %641 = vmatprep.subr.bf16.mxu0 0
        %642 = vmatpush1.bf16.msra.mxu0 0
        %643 = vmatprep.subr.bf16.mxu0 0
        %644 = vmatpush1.bf16.msra.mxu0 0
        %645 = vmatprep.subr.bf16.mxu0 0
        %646 = vmatpush1.bf16.msra.mxu0 0
        %647 = vmatprep.subr.bf16.mxu0 0
        %648 = vmatpush1.bf16.msra.mxu0 0
        %649 = vmatprep.subr.bf16.mxu0 0
        %650 = vmatpush1.bf16.msra.mxu0 0
        %651 = vmatprep.subr.bf16.mxu0 0
        %652 = vmatpush1.bf16.msra.mxu0 0
        %653 = vmatprep.subr.bf16.mxu0 0
        %654 = vmatpush1.bf16.msra.mxu0 0
        %655 = vmatprep.subr.bf16.mxu0 0
        %656 = vmatpush1.bf16.msra.mxu0 0
        %657 = vmatprep.mubr.bf16.mxu0 0
        %658 = vmatmul.mubr.bf16.gmra.mrb[0].mxu0 %v553
        %v659 = vpop.f32.mrb[0].mxu0
        %v660 = vadd.f32 %v575, %v659
        %v661 = vpop.f32.mrb[0].mxu0
        %v662 = vpop.f32.mrb[0].mxu0
        %v663 = vpop.f32.mrb[0].mxu0
        %664 = vdwg.mxu0
        %v665 = vlaneseq
        %v666 = vand.u32 %v665, 127
        %vm667 = vcmp.lt.s32.totalorder %v666, 4
        %v668 = vsel %vm667, 1, 0
        %vm669 = vcmp.eq.s32.totalorder %v668, 1
        %v670 = vsel %vm669, %v660, -inf
        %vm671 = vcmask 64512
        %v672 = vsel %vm671, %v670, -inf
        %673 = vmax.xlane.f32.xlu0 %v672
        %v674 = vpop.xlane.xlu0 %673
        %v675 = vsub.f32 %v670, %v674
        %v676 = vmul.f32 %v675, 1.442695
        %v677 = vpow.pop %v676
        %v678 = vsel %vm671, %v677, 0.0
        %679 = vadd.xlane.f32.xlu0 %v678
        %v680 = vpop.xlane.xlu0 %679
        %v681 = vlog2.pop %v680
        %v682 = vmul.f32 %v681, 0.6931472
        %v683 = vadd.f32 %v674, %v682
        %v684 = vsub.f32 %v660, %v683
        %vm685 = vcmp.eq.s32.totalorder %v666, 4
        %v686 = vsel %vm685, 1, 0
        %vm687 = vcmp.eq.s32.totalorder %v686, 1
        %v688 = vsel %vm687, %v660, 0.0
        %v689 = vsel %vm669, %v684, %v688
        %690 = vst.msk [vmem:[%s288] sm:$0xff] %vm671, %v689
        %p691 = scmp.lt.s32.totalorder %s19, 1
        %s692 = scalar_select %p691, %s19, 1
        %s693 = smul.addr %s692, 8
        %s694 = scalar_lea.vmem %s7, %s693
        // Predicated region
        $region53: #{tpu_custom_call.1} parent=47 // pred_check
          %p695 = pneg %p189
        $region54: #{tpu_custom_call.1} parent=47 // pred_check_branch
          %697 = sbr.rel (%p695) target = $region56
        $region55: #{tpu_custom_call.1} parent=47 // pred_region
          _
        $region56: #{tpu_custom_call.1} parent=47 // pred_fallthru
          _
      $region48: #{tpu_custom_call.1} parent=5 // pred_fallthru
        _
      %p698 = scmp.le.s32.totalorder 2, %s14
      // Predicated region
      $region57: #{tpu_custom_call.1} parent=5 // pred_check
        %p699 = pneg %p698
      $region58: #{tpu_custom_call.1} parent=5 // pred_check_branch
        %701 = sbr.rel (%p699) target = $region60
      $region59: #{tpu_custom_call.1} parent=5 // pred_region
        %s702 = ssub.s32 %s14, 2
        // Predicated region
        $region61: #{tpu_custom_call.1} parent=59 // pred_check
          %p703 = pneg %p195
        $region62: #{tpu_custom_call.1} parent=59 // pred_check_branch
          %705 = sbr.rel (%p703) target = $region64
        $region63: #{tpu_custom_call.1} parent=59 // pred_region
          %p706 = scmp.lt.s32.totalorder %s20, 1
          %s707 = scalar_select %p706, %s20, 1
          %s708 = smul.addr %s707, 8
          %s709 = scalar_lea.vmem %s7, %s708
        $region64: #{tpu_custom_call.1} parent=59 // pred_fallthru
          _
      $region60: #{tpu_custom_call.1} parent=5 // pred_fallthru
        _
    $region6: #{tpu_custom_call.1} parent=1 // loop_footer
      %s18 = sadd.s32 1, %s14
    $region7: #{tpu_custom_call.1} parent=1 // loop_footer_branch
      %13 = sbr.rel target = $region3
    $region8: #{tpu_custom_call.1} parent=1 // loop_exit
      _
    %710 = vsyncpa [#allocation3], 1
    %s711 = scalar_lea.sflag [#allocation3], 1
    %712 = vsyncpa %s711, 1

</llo_original>
